<compile_context>
chip_gen: v7x
topology: tpu7x:2x2x1
jax: 0.10.0
libtpu: 0.0.40
codegen_flags: <defaults>
</compile_context>

<pallas_src>
from functools import partial

import jax
import jax.numpy as jnp
from jax import lax
from jax.experimental import pallas as pl
from jax.experimental.pallas import tpu as pltpu  # noqa: F401  (kept for TPU-specific tuning hooks)


# ---------------------------------------------------------------------------
# Fused kernel: conv1 -> ReLU -> BN -> conv2 -> ReLU -> BN in one invocation.
# ---------------------------------------------------------------------------
def _contract_kernel(p1_ref, w1_ref, w2_ref, g_ref, b_ref, m1_ref, m2_ref, o_ref,
                     *, C, W, KH, KW, L, n1, n2, eps):
    # p1_ref : (KH*KW*Cin + 1, L)  im2col of x on the padded lane grid (+ ones row)
    # w1_ref : (C, KH*KW*Cin + 1)  [conv1 weight | conv1 bias]
    # w2_ref : (C, KH*KW*C  + 1)   [conv2 weight | conv2 bias]
    # g_ref  : (C, 1) gamma        b_ref : (C, 1) beta   (shared BatchNorm params)
    # m1_ref : (1, L) validity mask of conv1 outputs (n1 ones)
    # m2_ref : (1, L) validity mask of conv2 outputs (n2 ones)
    # o_ref  : (C, L)              lane-dense output (invalid lanes dropped outside)
    gamma = g_ref[...]
    beta = b_ref[...]

    def batchnorm(h, mask, count):
        # Training-mode BN: batch statistics, biased variance, single pass.
        hm = h * mask
        s = jnp.sum(hm, axis=1, keepdims=True)           # (C, 1) lane reduce
        q = jnp.sum(hm * h, axis=1, keepdims=True)       # masked sum of squares
        mean = s * (1.0 / count)
        var = q * (1.0 / count) - mean * mean
        return (h - mean) * lax.rsqrt(var + eps) * gamma + beta

    # ---- stage 1: conv1 (+bias folded) as one MXU matmul, ReLU, BN ----------
    h = jnp.dot(w1_ref[...], p1_ref[...],
                preferred_element_type=jnp.float32)       # (C, L)
    h = jnp.maximum(h, 0.0)
    h = batchnorm(h, m1_ref[...], n1)

    # ---- stage 2: build conv2 patch matrix with static lane shifts, then ----
    # ---- one MXU matmul (bias folded via a ones row). -----------------------
    max_shift = (KH - 1) * W + (KW - 1)
    hp = jnp.concatenate([h, jnp.zeros((C, max_shift), jnp.float32)], axis=1)
    rows = [hp[:, dy * W + dx: dy * W + dx + L]           # shifted copy per tap
            for dy in range(KH) for dx in range(KW)]
    rows.append(jnp.ones((1, L), jnp.float32))            # bias fold
    p2 = jnp.concatenate(rows, axis=0)                    # (KH*KW*C + 1, L)

    h2 = jnp.dot(w2_ref[...], p2,
                 preferred_element_type=jnp.float32)      # (C, L)
    h2 = jnp.maximum(h2, 0.0)
    h2 = batchnorm(h2, m2_ref[...], n2)

    o_ref[...] = h2                                       # lane-dense store


# ---------------------------------------------------------------------------
# Wrapper: NCHW in, NCHW out (matches PyTorch).  All reshuffling outside the
# kernel is tiny layout plumbing handled by XLA.
# ---------------------------------------------------------------------------
def contract_forward(x_nchw, params, eps=1e-5):
    w1, b1 = params["w1"], params["b1"]        # (C, Cin, KH, KW), (C,)
    w2, b2 = params["w2"], params["b2"]        # (C, C,   KH, KW), (C,)
    gamma, beta = params["gamma"], params["beta"]

    N, Cin, H, W = x_nchw.shape
    C, _, KH, KW = w1.shape
    H1, W1 = H - KH + 1, W - KW + 1            # conv1 output spatial
    H2, W2 = H1 - KH + 1, W1 - KW + 1          # conv2 output spatial
    L = N * H * W                              # padded ("holey") lane grid

    # Input laid out as (Cin, N*H*W): channels on sublanes, spatial on lanes.
    xf = jnp.transpose(x_nchw, (1, 0, 2, 3)).reshape(Cin, L)

    # im2col for conv1 on the padded lane grid: one lane-shifted copy per tap,
    # plus a ones row so the bias folds into the weight matrix.
    rows = []
    for dy in range(KH):
        for dx in range(KW):
            s = dy * W + dx
            if s == 0:
                rows.append(xf)
            else:
                rows.append(jnp.concatenate(
                    [xf[:, s:], jnp.zeros((Cin, s), xf.dtype)], axis=1))
    rows.append(jnp.ones((1, L), xf.dtype))
    p1 = jnp.concatenate(rows, axis=0)                       # (KH*KW*Cin + 1, L)

    # Weights: OIHW -> (Cout, KH*KW*Cin), bias appended as the trailing column.
    w1r = jnp.concatenate(
        [jnp.transpose(w1, (0, 2, 3, 1)).reshape(C, KH * KW * Cin),
         b1.reshape(C, 1)], axis=1)                          # (C, KH*KW*Cin + 1)
    w2r = jnp.concatenate(
        [jnp.transpose(w2, (0, 2, 3, 1)).reshape(C, KH * KW * C),
         b2.reshape(C, 1)], axis=1)                          # (C, KH*KW*C + 1)

    # Validity masks (which lanes of the padded grid are real conv outputs).
    def valid_mask(ho, wo):
        m = (jnp.arange(H) < ho)[:, None] & (jnp.arange(W) < wo)[None, :]
        return jnp.broadcast_to(m, (N, H, W)).reshape(1, L).astype(jnp.float32)

    m1 = valid_mask(H1, W1)                                  # N*H1*W1 ones
    m2 = valid_mask(H2, W2)                                  # N*H2*W2 ones

    out_flat = pl.pallas_call(
        partial(_contract_kernel, C=C, W=W, KH=KH, KW=KW, L=L,
                n1=N * H1 * W1, n2=N * H2 * W2, eps=eps),
        out_shape=jax.ShapeDtypeStruct((C, L), jnp.float32),
    )(p1, w1r, w2r, gamma.reshape(C, 1), beta.reshape(C, 1), m1, m2)

    # Keep only the valid conv2 output positions; back to NCHW.
    out = out_flat.reshape(C, N, H, W)[:, :, :H2, :W2]
    return jnp.transpose(out, (1, 0, 2, 3))                  # (N, C, H2, W2)


# ---------------------------------------------------------------------------
# Pure-JAX reference for verification.
# ---------------------------------------------------------------------------
def _ref_forward(x_nchw, params, eps=1e-5):
    def conv(x, w, b):
        y = lax.conv_general_dilated(
            x, w, window_strides=(1, 1), padding="VALID",
            dimension_numbers=("NCHW", "OIHW", "NCHW"))
        return y + b.reshape(1, -1, 1, 1)

    def bn(x, g, bt):
        mean = jnp.mean(x, axis=(0, 2, 3), keepdims=True)
        var = jnp.mean((x - mean) ** 2, axis=(0, 2, 3), keepdims=True)
        return (x - mean) * lax.rsqrt(var + eps) * g.reshape(1, -1, 1, 1) \
            + bt.reshape(1, -1, 1, 1)

    out = bn(jnp.maximum(conv(x_nchw, params["w1"], params["b1"]), 0.0),
             params["gamma"], params["beta"])
    out = bn(jnp.maximum(conv(out, params["w2"], params["b2"]), 0.0),
             params["gamma"], params["beta"])
    return out


if __name__ == "__main__":
    # Contract(in_channel=4, out_channel=8, kernel_size=3) on x: (2, 4, 16, 16)
    in_channel, out_channel, kernel_size = 4, 8, 3
    key = jax.random.PRNGKey(0)
    kx, k1, k2, k3, k4 = jax.random.split(key, 5)
    x = jax.random.normal(kx, (2, in_channel, 16, 16), jnp.float32)
    params = {
        "w1": 0.1 * jax.random.normal(
            k1, (out_channel, in_channel, kernel_size, kernel_size), jnp.float32),
        "b1": 0.1 * jax.random.normal(k2, (out_channel,), jnp.float32),
        "w2": 0.1 * jax.random.normal(
            k3, (out_channel, out_channel, kernel_size, kernel_size), jnp.float32),
        "b2": 0.1 * jax.random.normal(k4, (out_channel,), jnp.float32),
        "gamma": jnp.ones((out_channel,), jnp.float32),   # BatchNorm2d default weight
        "beta": jnp.zeros((out_channel,), jnp.float32),   # BatchNorm2d default bias
    }

    out = jax.block_until_ready(jax.jit(contract_forward)(x, params))
    ref = jax.block_until_ready(_ref_forward(x, params))

    assert out.shape == (2, out_channel, 12, 12), out.shape
    max_err = float(jnp.max(jnp.abs(out - ref)))
    assert jnp.allclose(out, ref, atol=5e-4, rtol=5e-4), max_err

    print("KERNEL_OK")
</pallas_src>

<mosaic_0001>
module attributes {stable_mosaic.version = 11 : i64} {
  func.func @_contract_kernel(%arg0: memref<37x512xf32, #tpu.memory_space<vmem>>, %arg1: memref<8x37xf32, #tpu.memory_space<vmem>>, %arg2: memref<8x73xf32, #tpu.memory_space<vmem>>, %arg3: memref<8x1xf32, #tpu.memory_space<vmem>>, %arg4: memref<8x1xf32, #tpu.memory_space<vmem>>, %arg5: memref<1x512xf32, #tpu.memory_space<vmem>>, %arg6: memref<1x512xf32, #tpu.memory_space<vmem>>, %arg7: memref<8x512xf32, #tpu.memory_space<vmem>>) attributes {dimension_semantics = [], scalar_prefetch = 0 : i64, scratch_operands = 0 : i64, tpu.core_type = #tpu.core_type<tc>} {
    %c0 = arith.constant 0 : index
    %c0_0 = arith.constant 0 : index
    %0 = vector.load %arg3[%c0, %c0_0] : memref<8x1xf32, #tpu.memory_space<vmem>>, vector<8x1xf32>
    %c0_1 = arith.constant 0 : index
    %c0_2 = arith.constant 0 : index
    %1 = vector.load %arg4[%c0_1, %c0_2] : memref<8x1xf32, #tpu.memory_space<vmem>>, vector<8x1xf32>
    %c0_3 = arith.constant 0 : index
    %c0_4 = arith.constant 0 : index
    %2 = vector.load %arg1[%c0_3, %c0_4] : memref<8x37xf32, #tpu.memory_space<vmem>>, vector<8x37xf32>
    %c0_5 = arith.constant 0 : index
    %c0_6 = arith.constant 0 : index
    %3 = vector.load %arg0[%c0_5, %c0_6] : memref<37x512xf32, #tpu.memory_space<vmem>>, vector<37x512xf32>
    %cst = arith.constant dense<0.000000e+00> : vector<8x512xf32>
    %4 = tpu.matmul %2, %3, %cst {dimension_numbers = #tpu.dot_dimension_numbers<[1], [0], [0], [1], [0, 0, 1, 1], [], []>} : vector<8x37xf32>, vector<37x512xf32>, vector<8x512xf32> -> vector<8x512xf32>
    %cst_7 = arith.constant 0.000000e+00 : f32
    %5 = vector.broadcast %cst_7 : f32 to vector<8x512xf32>
    %6 = arith.maximumf %4, %5 : vector<8x512xf32>
    %c0_8 = arith.constant 0 : index
    %c0_9 = arith.constant 0 : index
    %7 = vector.load %arg5[%c0_8, %c0_9] : memref<1x512xf32, #tpu.memory_space<vmem>>, vector<1x512xf32>
    %8 = vector.broadcast %7 : vector<1x512xf32> to vector<8x512xf32>
    %9 = arith.mulf %6, %8 : vector<8x512xf32>
    %cst_10 = arith.constant dense<0.000000e+00> : vector<8xf32>
    %10 = vector.multi_reduction <add>, %9, %cst_10 [1] : vector<8x512xf32> to vector<8xf32>
    %11 = vector.shape_cast %10 : vector<8xf32> to vector<8x1xf32>
    %12 = arith.mulf %9, %6 : vector<8x512xf32>
    %cst_11 = arith.constant dense<0.000000e+00> : vector<8xf32>
    %13 = vector.multi_reduction <add>, %12, %cst_11 [1] : vector<8x512xf32> to vector<8xf32>
    %14 = vector.shape_cast %13 : vector<8xf32> to vector<8x1xf32>
    %cst_12 = arith.constant 0.00255102036 : f32
    %15 = vector.broadcast %cst_12 : f32 to vector<8x1xf32>
    %16 = arith.mulf %11, %15 : vector<8x1xf32>
    %cst_13 = arith.constant 0.00255102036 : f32
    %17 = vector.broadcast %cst_13 : f32 to vector<8x1xf32>
    %18 = arith.mulf %14, %17 : vector<8x1xf32>
    %19 = arith.mulf %16, %16 : vector<8x1xf32>
    %20 = arith.subf %18, %19 : vector<8x1xf32>
    %21 = vector.broadcast %16 : vector<8x1xf32> to vector<8x512xf32>
    %22 = arith.subf %6, %21 : vector<8x512xf32>
    %cst_14 = arith.constant 9.99999974E-6 : f32
    %23 = vector.broadcast %cst_14 : f32 to vector<8x1xf32>
    %24 = arith.addf %20, %23 : vector<8x1xf32>
    %25 = math.rsqrt %24 : vector<8x1xf32>
    %26 = vector.broadcast %25 : vector<8x1xf32> to vector<8x512xf32>
    %27 = arith.mulf %22, %26 : vector<8x512xf32>
    %28 = vector.broadcast %0 : vector<8x1xf32> to vector<8x512xf32>
    %29 = arith.mulf %27, %28 : vector<8x512xf32>
    %30 = vector.broadcast %1 : vector<8x1xf32> to vector<8x512xf32>
    %31 = arith.addf %29, %30 : vector<8x512xf32>
    %cst_15 = arith.constant 0.000000e+00 : f32
    %32 = vector.broadcast %cst_15 : f32 to vector<8x34xf32>
    %33 = tpu.concatenate %31, %32 in 1 : vector<8x512xf32>, vector<8x34xf32> -> vector<8x546xf32>
    %34 = vector.extract_strided_slice %33 {offsets = [0, 0], sizes = [8, 512], strides = [1, 1]} : vector<8x546xf32> to vector<8x512xf32>
    %35 = vector.extract_strided_slice %33 {offsets = [0, 1], sizes = [8, 512], strides = [1, 1]} : vector<8x546xf32> to vector<8x512xf32>
    %36 = vector.extract_strided_slice %33 {offsets = [0, 2], sizes = [8, 512], strides = [1, 1]} : vector<8x546xf32> to vector<8x512xf32>
    %37 = vector.extract_strided_slice %33 {offsets = [0, 16], sizes = [8, 512], strides = [1, 1]} : vector<8x546xf32> to vector<8x512xf32>
    %38 = vector.extract_strided_slice %33 {offsets = [0, 17], sizes = [8, 512], strides = [1, 1]} : vector<8x546xf32> to vector<8x512xf32>
    %39 = vector.extract_strided_slice %33 {offsets = [0, 18], sizes = [8, 512], strides = [1, 1]} : vector<8x546xf32> to vector<8x512xf32>
    %40 = vector.extract_strided_slice %33 {offsets = [0, 32], sizes = [8, 512], strides = [1, 1]} : vector<8x546xf32> to vector<8x512xf32>
    %41 = vector.extract_strided_slice %33 {offsets = [0, 33], sizes = [8, 512], strides = [1, 1]} : vector<8x546xf32> to vector<8x512xf32>
    %42 = vector.extract_strided_slice %33 {offsets = [0, 34], sizes = [8, 512], strides = [1, 1]} : vector<8x546xf32> to vector<8x512xf32>
    %cst_16 = arith.constant 1.000000e+00 : f32
    %43 = vector.broadcast %cst_16 : f32 to vector<1x512xf32>
    %44 = tpu.concatenate %34, %35, %36, %37, %38, %39, %40, %41, %42, %43 in 0 : vector<8x512xf32>, vector<8x512xf32>, vector<8x512xf32>, vector<8x512xf32>, vector<8x512xf32>, vector<8x512xf32>, vector<8x512xf32>, vector<8x512xf32>, vector<8x512xf32>, vector<1x512xf32> -> vector<73x512xf32>
    %c0_17 = arith.constant 0 : index
    %c0_18 = arith.constant 0 : index
    %45 = vector.load %arg2[%c0_17, %c0_18] : memref<8x73xf32, #tpu.memory_space<vmem>>, vector<8x73xf32>
    %cst_19 = arith.constant dense<0.000000e+00> : vector<8x512xf32>
    %46 = tpu.matmul %45, %44, %cst_19 {dimension_numbers = #tpu.dot_dimension_numbers<[1], [0], [0], [1], [0, 0, 1, 1], [], []>} : vector<8x73xf32>, vector<73x512xf32>, vector<8x512xf32> -> vector<8x512xf32>
    %cst_20 = arith.constant 0.000000e+00 : f32
    %47 = vector.broadcast %cst_20 : f32 to vector<8x512xf32>
    %48 = arith.maximumf %46, %47 : vector<8x512xf32>
    %c0_21 = arith.constant 0 : index
    %c0_22 = arith.constant 0 : index
    %49 = vector.load %arg6[%c0_21, %c0_22] : memref<1x512xf32, #tpu.memory_space<vmem>>, vector<1x512xf32>
    %50 = vector.broadcast %49 : vector<1x512xf32> to vector<8x512xf32>
    %51 = arith.mulf %48, %50 : vector<8x512xf32>
    %cst_23 = arith.constant dense<0.000000e+00> : vector<8xf32>
    %52 = vector.multi_reduction <add>, %51, %cst_23 [1] : vector<8x512xf32> to vector<8xf32>
    %53 = vector.shape_cast %52 : vector<8xf32> to vector<8x1xf32>
    %54 = arith.mulf %51, %48 : vector<8x512xf32>
    %cst_24 = arith.constant dense<0.000000e+00> : vector<8xf32>
    %55 = vector.multi_reduction <add>, %54, %cst_24 [1] : vector<8x512xf32> to vector<8xf32>
    %56 = vector.shape_cast %55 : vector<8xf32> to vector<8x1xf32>
    %cst_25 = arith.constant 0.00347222225 : f32
    %57 = vector.broadcast %cst_25 : f32 to vector<8x1xf32>
    %58 = arith.mulf %53, %57 : vector<8x1xf32>
    %cst_26 = arith.constant 0.00347222225 : f32
    %59 = vector.broadcast %cst_26 : f32 to vector<8x1xf32>
    %60 = arith.mulf %56, %59 : vector<8x1xf32>
    %61 = arith.mulf %58, %58 : vector<8x1xf32>
    %62 = arith.subf %60, %61 : vector<8x1xf32>
    %63 = vector.broadcast %58 : vector<8x1xf32> to vector<8x512xf32>
    %64 = arith.subf %48, %63 : vector<8x512xf32>
    %cst_27 = arith.constant 9.99999974E-6 : f32
    %65 = vector.broadcast %cst_27 : f32 to vector<8x1xf32>
    %66 = arith.addf %62, %65 : vector<8x1xf32>
    %67 = math.rsqrt %66 : vector<8x1xf32>
    %68 = vector.broadcast %67 : vector<8x1xf32> to vector<8x512xf32>
    %69 = arith.mulf %64, %68 : vector<8x512xf32>
    %70 = vector.broadcast %0 : vector<8x1xf32> to vector<8x512xf32>
    %71 = arith.mulf %69, %70 : vector<8x512xf32>
    %72 = vector.broadcast %1 : vector<8x1xf32> to vector<8x512xf32>
    %73 = arith.addf %71, %72 : vector<8x512xf32>
    %c0_28 = arith.constant 0 : index
    %c0_29 = arith.constant 0 : index
    %74 = vector.load %arg7[%c0_28, %c0_29] : memref<8x512xf32, #tpu.memory_space<vmem>>, vector<8x512xf32>
    tpu.vector_store %arg7[%c0_28, %c0_29], %73 {strides = array<i32>} : memref<8x512xf32, #tpu.memory_space<vmem>>, vector<8x512xf32>,
    return
  }
}

</mosaic_0001>

<llo_original>
// kernel: contract_forward.1
$region0: #{contract_forward.1}
  #allocation0 [shape = 'u32[]', space=smem, size = 0x4, offset = 0x4, fixed_abs, tag = 'smem constant byte address 0x4 - core index']
  #allocation1 [shape = 'u32[144,128]{1,0:T(1,128)}', space=vmem, size = 0x12000, scoped, tag = 'internal scratch']
  %s0 = inlined_call_operand.vmem [shape: f32[37,512], index: 0, kind: input, shape index: {}]
  %s1 = inlined_call_operand.vmem [shape: f32[8,37], index: 1, kind: input, shape index: {}]
  %s2 = inlined_call_operand.vmem [shape: f32[8,73], index: 2, kind: input, shape index: {}]
  %s3 = inlined_call_operand.vmem [shape: f32[8,1], index: 3, kind: input, shape index: {}]
  %s4 = inlined_call_operand.vmem [shape: f32[8,1], index: 4, kind: input, shape index: {}]
  %s5 = inlined_call_operand.vmem [shape: f32[1,512], index: 5, kind: input, shape index: {}]
  %s6 = inlined_call_operand.vmem [shape: f32[1,512], index: 6, kind: input, shape index: {}]
  %s7 = inlined_call_operand.vmem [shape: f32[8,512], index: 7, kind: output, shape index: {}]
  %s8 = sld [smem:[#allocation0]]
  $region38: #{contract_forward.1} parent=0
    _
  %s10 = ssub.s32 1, %s8
  %s11 = scalar_select 0, %s10, %s8
  // Predicated region
  $region2: #{contract_forward.1} parent=0 // pred_check
    _
  $region3: #{contract_forward.1} parent=0 // pred_check_branch
    %13 = sbr.rel (0) target = $region5
  $region4: #{contract_forward.1} parent=0 // pred_region
    _
  $region5: #{contract_forward.1} parent=0 // pred_fallthru
    _
  // Predicated region
  $region6: #{contract_forward.1} parent=0 // pred_check
    _
  $region7: #{contract_forward.1} parent=0 // pred_check_branch
    %15 = sbr.rel (0) target = $region9
  $region8: #{contract_forward.1} parent=0 // pred_region
    _
  $region9: #{contract_forward.1} parent=0 // pred_fallthru
    _
  // Predicated region
  $region10: #{contract_forward.1} parent=0 // pred_check
    _
  $region11: #{contract_forward.1} parent=0 // pred_check_branch
    %17 = sbr.rel (0) target = $region13
  $region12: #{contract_forward.1} parent=0 // pred_region
    _
  $region13: #{contract_forward.1} parent=0 // pred_fallthru
    _
  // Predicated region
  $region14: #{contract_forward.1} parent=0 // pred_check
    _
  $region15: #{contract_forward.1} parent=0 // pred_check_branch
    %19 = sbr.rel (0) target = $region17
  $region16: #{contract_forward.1} parent=0 // pred_region
    _
  $region17: #{contract_forward.1} parent=0 // pred_fallthru
    _
  // Predicated region
  $region18: #{contract_forward.1} parent=0 // pred_check
    _
  $region19: #{contract_forward.1} parent=0 // pred_check_branch
    %21 = sbr.rel (0) target = $region21
  $region20: #{contract_forward.1} parent=0 // pred_region
    _
  $region21: #{contract_forward.1} parent=0 // pred_fallthru
    _
  // Predicated region
  $region22: #{contract_forward.1} parent=0 // pred_check
    _
  $region23: #{contract_forward.1} parent=0 // pred_check_branch
    %23 = sbr.rel (0) target = $region25
  $region24: #{contract_forward.1} parent=0 // pred_region
    _
  $region25: #{contract_forward.1} parent=0 // pred_fallthru
    _
  // Predicated region
  $region26: #{contract_forward.1} parent=0 // pred_check
    _
  $region27: #{contract_forward.1} parent=0 // pred_check_branch
    %25 = sbr.rel (0) target = $region29
  $region28: #{contract_forward.1} parent=0 // pred_region
    _
  $region29: #{contract_forward.1} parent=0 // pred_fallthru
    _
  %v26 = vld [vmem:[%s3] sm:$0xff]
  %v27 = vld [vmem:[%s4] sm:$0xff]
  %v28 = vld [vmem:[%s1] sm:$0xff]
  %v29 = vld [vmem:[%s0] sm:$0xff]
  %v30 = vld [vmem:[%s0 + $0x8] sm:$0xff]
  %v31 = vld [vmem:[%s0 + $0x10] sm:$0xff]
  %v32 = vld [vmem:[%s0 + $0x18] sm:$0xff]
  %v33 = vld [vmem:[%s0 + $0x20] sm:$0xff]
  %v34 = vld [vmem:[%s0 + $0x28] sm:$0xff]
  %v35 = vld [vmem:[%s0 + $0x30] sm:$0xff]
  %v36 = vld [vmem:[%s0 + $0x38] sm:$0xff]
  %v37 = vld [vmem:[%s0 + $0x40] sm:$0xff]
  %v38 = vld [vmem:[%s0 + $0x48] sm:$0xff]
  %v39 = vld [vmem:[%s0 + $0x50] sm:$0xff]
  %v40 = vld [vmem:[%s0 + $0x58] sm:$0xff]
  %v41 = vld [vmem:[%s0 + $0x60] sm:$0xff]
  %v42 = vld [vmem:[%s0 + $0x68] sm:$0xff]
  %v43 = vld [vmem:[%s0 + $0x70] sm:$0xff]
  %v44 = vld [vmem:[%s0 + $0x78] sm:$0xff]
  %v45 = vld [vmem:[%s0 + $0x80] sm:$0x1f]
  %v46 = vld [vmem:[%s0 + $0x88] sm:$0x1f]
  %v47 = vld [vmem:[%s0 + $0x90] sm:$0x1f]
  %v48 = vld [vmem:[%s0 + $0x98] sm:$0x1f]
  %vm49 = vcmask 302080
  %v51 = vsel %vm49, %v28, 0
  %vm53 = vcmask 1044480
  %v55 = vsel %vm53, %v45, 0
  %v58 = vsel %vm53, %v46, 0
  %v61 = vsel %vm53, %v47, 0
  %v64 = vsel %vm53, %v48, 0
  %66 = vmatprep.subr.mxu0 %v30
  %67 = vmatpush1.msra.mxu0 %v29
  %68 = vmatprep.subr.mxu0 %v34
  %69 = vmatpush1.msra.mxu0 %v33
  %70 = vmatprep.subr.mxu0 %v38
  %71 = vmatpush1.msra.mxu0 %v37
  %72 = vmatprep.subr.mxu0 %v42
  %73 = vmatpush1.msra.mxu0 %v41
  %74 = vmatprep.subr.mxu0 %v58
  %75 = vmatpush1.msra.mxu0 %v55
  %76 = vmatprep.subr.mxu0 0.0
  %77 = vmatpush1.msra.mxu0 0.0
  %78 = vmatprep.subr.mxu0 0.0
  %79 = vmatpush1.msra.mxu0 0.0
  %80 = vmatprep.subr.mxu0 0.0
  %81 = vmatpush1.msra.mxu0 0.0
  %82 = vmatprep.subr.mxu0 0.0
  %83 = vmatpush1.msra.mxu0 0.0
  %84 = vmatprep.subr.mxu0 0.0
  %85 = vmatpush1.msra.mxu0 0.0
  %86 = vmatprep.subr.mxu0 0.0
  %87 = vmatpush1.msra.mxu0 0.0
  %88 = vmatprep.subr.mxu0 0.0
  %89 = vmatpush1.msra.mxu0 0.0
  %90 = vmatprep.subr.mxu0 0.0
  %91 = vmatpush1.msra.mxu0 0.0
  %92 = vmatprep.subr.mxu0 0.0
  %93 = vmatpush1.msra.mxu0 0.0
  %94 = vmatprep.subr.mxu0 0.0
  %95 = vmatpush1.msra.mxu0 0.0
  %96 = vmatprep.subr.mxu0 0.0
  %97 = vmatpush1.msra.mxu0 0.0
  %98 = vmatprep.subr.mxu0 0.0
  %99 = vmatpush1.msra.mxu0 0.0
  %100 = vmatprep.subr.mxu0 0.0
  %101 = vmatpush1.msra.mxu0 0.0
  %102 = vmatprep.subr.mxu0 0.0
  %103 = vmatpush1.msra.mxu0 0.0
  %104 = vmatprep.subr.mxu0 0.0
  %105 = vmatpush1.msra.mxu0 0.0
  %106 = vmatprep.subr.mxu0 0.0
  %107 = vmatpush1.msra.mxu0 0.0
  %108 = vmatprep.subr.mxu0 0.0
  %109 = vmatpush1.msra.mxu0 0.0
  %110 = vmatprep.subr.mxu0 0.0
  %111 = vmatpush1.msra.mxu0 0.0
  %112 = vmatprep.subr.mxu0 0.0
  %113 = vmatpush1.msra.mxu0 0.0
  %114 = vmatprep.subr.mxu0 0.0
  %115 = vmatpush1.msra.mxu0 0.0
  %116 = vmatprep.subr.mxu0 0.0
  %117 = vmatpush1.msra.mxu0 0.0
  %118 = vmatprep.subr.mxu0 0.0
  %119 = vmatpush1.msra.mxu0 0.0
  %120 = vmatprep.subr.mxu0 0.0
  %121 = vmatpush1.msra.mxu0 0.0
  %122 = vmatprep.subr.mxu0 0.0
  %123 = vmatpush1.msra.mxu0 0.0
  %124 = vmatprep.subr.mxu0 0.0
  %125 = vmatpush1.msra.mxu0 0.0
  %126 = vmatprep.subr.mxu0 0.0
  %127 = vmatpush1.msra.mxu0 0.0
  %128 = vmatprep.subr.mxu0 0.0
  %129 = vmatpush1.msra.mxu0 0.0
  %130 = vmatprep.mubr.f32.mxu0 0.0
  %131 = vmatmul.mubr.f32.gmra.mrb[0].mxu0 %v51
  %v132 = vpop.f32.mrb[0].mxu0
  %v133 = vadd.f32 0.0, %v132
  %v134 = vpop.f32.mrb[0].mxu0
  %v135 = vadd.f32 0.0, %v134
  %136 = vdwg.mxu0
  %137 = vmatprep.subr.mxu0 %v32
  %138 = vmatpush1.msra.mxu0 %v31
  %139 = vmatprep.subr.mxu0 %v36
  %140 = vmatpush1.msra.mxu0 %v35
  %141 = vmatprep.subr.mxu0 %v40
  %142 = vmatpush1.msra.mxu0 %v39
  %143 = vmatprep.subr.mxu0 %v44
  %144 = vmatpush1.msra.mxu0 %v43
  %145 = vmatprep.subr.mxu0 %v64
  %146 = vmatpush1.msra.mxu0 %v61
  %147 = vmatprep.subr.mxu0 0.0
  %148 = vmatpush1.msra.mxu0 0.0
  %149 = vmatprep.subr.mxu0 0.0
  %150 = vmatpush1.msra.mxu0 0.0
  %151 = vmatprep.subr.mxu0 0.0
  %152 = vmatpush1.msra.mxu0 0.0
  %153 = vmatprep.subr.mxu0 0.0
  %154 = vmatpush1.msra.mxu0 0.0
  %155 = vmatprep.subr.mxu0 0.0
  %156 = vmatpush1.msra.mxu0 0.0
  %157 = vmatprep.subr.mxu0 0.0
  %158 = vmatpush1.msra.mxu0 0.0
  %159 = vmatprep.subr.mxu0 0.0
  %160 = vmatpush1.msra.mxu0 0.0
  %161 = vmatprep.subr.mxu0 0.0
  %162 = vmatpush1.msra.mxu0 0.0
  %163 = vmatprep.subr.mxu0 0.0
  %164 = vmatpush1.msra.mxu0 0.0
  %165 = vmatprep.subr.mxu0 0.0
  %166 = vmatpush1.msra.mxu0 0.0
  %167 = vmatprep.subr.mxu0 0.0
  %168 = vmatpush1.msra.mxu0 0.0
  %169 = vmatprep.subr.mxu0 0.0
  %170 = vmatpush1.msra.mxu0 0.0
  %171 = vmatprep.subr.mxu0 0.0
  %172 = vmatpush1.msra.mxu0 0.0
  %173 = vmatprep.subr.mxu0 0.0
  %174 = vmatpush1.msra.mxu0 0.0
  %175 = vmatprep.subr.mxu0 0.0
  %176 = vmatpush1.msra.mxu0 0.0
  %177 = vmatprep.subr.mxu0 0.0
  %178 = vmatpush1.msra.mxu0 0.0
  %179 = vmatprep.subr.mxu0 0.0
  %180 = vmatpush1.msra.mxu0 0.0
  %181 = vmatprep.subr.mxu0 0.0
  %182 = vmatpush1.msra.mxu0 0.0
  %183 = vmatprep.subr.mxu0 0.0
  %184 = vmatpush1.msra.mxu0 0.0
  %185 = vmatprep.subr.mxu0 0.0
  %186 = vmatpush1.msra.mxu0 0.0
  %187 = vmatprep.subr.mxu0 0.0
  %188 = vmatpush1.msra.mxu0 0.0
  %189 = vmatprep.subr.mxu0 0.0
  %190 = vmatpush1.msra.mxu0 0.0
  %191 = vmatprep.subr.mxu0 0.0
  %192 = vmatpush1.msra.mxu0 0.0
  %193 = vmatprep.subr.mxu0 0.0
  %194 = vmatpush1.msra.mxu0 0.0
  %195 = vmatprep.subr.mxu0 0.0
  %196 = vmatpush1.msra.mxu0 0.0
  %197 = vmatprep.subr.mxu0 0.0
  %198 = vmatpush1.msra.mxu0 0.0
  %199 = vmatprep.subr.mxu0 0.0
  %200 = vmatpush1.msra.mxu0 0.0
  %201 = vmatprep.mubr.f32.mxu0 0.0
  %202 = vmatmul.mubr.f32.gmra.mrb[0].mxu0 %v51
  %v203 = vpop.f32.mrb[0].mxu0
  %v204 = vadd.f32 0.0, %v203
  %v205 = vpop.f32.mrb[0].mxu0
  %v206 = vadd.f32 0.0, %v205
  %207 = vdwg.mxu0
  %v208 = vmax.f32 %v133, 0.0
  %v209 = vmax.f32 %v135, 0.0
  %v210 = vmax.f32 %v204, 0.0
  %v211 = vmax.f32 %v206, 0.0
  %v212 = vld [vmem:[%s5] sm:$0xf]
  %v214 = vlaneseq
  %v215 = vshrl.u32 %v214, 7
  %v216 = vsub.s32 0, %v215
  %v217 = vrot.slane %v212, %v216
  %v218 = vlaneseq
  %v219 = vshrl.u32 %v218, 7
  %v220 = vsub.s32 1, %v219
  %v221 = vrot.slane %v212, %v220
  %v222 = vlaneseq
  %v223 = vshrl.u32 %v222, 7
  %v224 = vsub.s32 2, %v223
  %v225 = vrot.slane %v212, %v224
  %v226 = vlaneseq
  %v227 = vshrl.u32 %v226, 7
  %v228 = vsub.s32 3, %v227
  %v229 = vrot.slane %v212, %v228
  %v234 = vmul.f32 %v208, %v217
  %v235 = vmul.f32 %v209, %v221
  %v236 = vmul.f32 %v210, %v225
  %v237 = vmul.f32 %v211, %v229
  %v238 = vadd.f32 %v234, %v235
  %v239 = vadd.f32 %v238, %v236
  %v240 = vadd.f32 %v239, %v237
  %241 = vadd.xlane.f32.xlu0 %v240
  %v242 = vpop.xlane.xlu0 %241
  %v243 = vmul.f32 %v234, %v208
  %v244 = vmul.f32 %v235, %v209
  %v245 = vmul.f32 %v236, %v210
  %v246 = vmul.f32 %v237, %v211
  %v247 = vadd.f32 %v243, %v244
  %v248 = vadd.f32 %v247, %v245
  %v249 = vadd.f32 %v248, %v246
  %250 = vadd.xlane.f32.xlu0 %v249
  %v251 = vpop.xlane.xlu0 %250
  %v252 = vmul.f32 %v242, 0.0025510204
  %v253 = vmul.f32 %v251, 0.0025510204
  %v254 = vmul.f32 %v252, %v252
  %v255 = vsub.f32 %v253, %v254
  %v256 = vsub.f32 %v208, %v252
  %v257 = vsub.f32 %v209, %v252
  %v258 = vsub.f32 %v210, %v252
  %v259 = vsub.f32 %v211, %v252
  %v260 = vadd.f32 %v255, 1e-05
  %v261 = vrsqrt.pop %v260
  %v262 = vmul.f32 %v256, %v261
  %v263 = vmul.f32 %v257, %v261
  %v264 = vmul.f32 %v258, %v261
  %v265 = vmul.f32 %v259, %v261
  %267 = vset.pattern.permute.xlu0 0
  %268 = vperm.xlu0 %267, %v26
  %v269 = vpop.permute.xlu0 %268
  %v271 = vmul.f32 %v262, %v269
  %v272 = vmul.f32 %v263, %v269
  %v273 = vmul.f32 %v264, %v269
  %v274 = vmul.f32 %v265, %v269
  %276 = vset.pattern.permute.xlu0 0
  %277 = vperm.xlu0 %276, %v27
  %v278 = vpop.permute.xlu0 %277
  %v280 = vadd.f32 %v271, %v278
  %v281 = vadd.f32 %v272, %v278
  %v282 = vadd.f32 %v273, %v278
  %v283 = vadd.f32 %v274, %v278
  %289 = vrot.lane.b32.xlu0 %v280, 127
  %v290 = vpop.permute.xlu0 %289
  %291 = vrot.lane.b32.xlu0 %v281, 127
  %v292 = vpop.permute.xlu0 %291
  %293 = vrot.lane.b32.xlu0 %v282, 127
  %v294 = vpop.permute.xlu0 %293
  %295 = vrot.lane.b32.xlu0 %v283, 127
  %v296 = vpop.permute.xlu0 %295
  %297 = vrot.lane.b32.xlu0 0.0, 127
  %v298 = vpop.permute.xlu0 %297
  %vm299 = vcmask 1039360
  %v300 = vsel %vm299, %v290, %v292
  %v301 = vsel %vm299, %v292, %v294
  %v302 = vsel %vm299, %v294, %v296
  %v303 = vsel %vm299, %v296, %v298
  %308 = vrot.lane.b32.xlu0 %v280, 126
  %v309 = vpop.permute.xlu0 %308
  %310 = vrot.lane.b32.xlu0 %v281, 126
  %v311 = vpop.permute.xlu0 %310
  %312 = vrot.lane.b32.xlu0 %v282, 126
  %v313 = vpop.permute.xlu0 %312
  %314 = vrot.lane.b32.xlu0 %v283, 126
  %v315 = vpop.permute.xlu0 %314
  %316 = vrot.lane.b32.xlu0 0.0, 126
  %v317 = vpop.permute.xlu0 %316
  %vm318 = vcmask 1031168
  %v319 = vsel %vm318, %v309, %v311
  %v320 = vsel %vm318, %v311, %v313
  %v321 = vsel %vm318, %v313, %v315
  %v322 = vsel %vm318, %v315, %v317
  %327 = vrot.lane.b32.xlu0 %v280, 112
  %v328 = vpop.permute.xlu0 %327
  %329 = vrot.lane.b32.xlu0 %v281, 112
  %v330 = vpop.permute.xlu0 %329
  %331 = vrot.lane.b32.xlu0 %v282, 112
  %v332 = vpop.permute.xlu0 %331
  %333 = vrot.lane.b32.xlu0 %v283, 112
  %v334 = vpop.permute.xlu0 %333
  %335 = vrot.lane.b32.xlu0 0.0, 112
  %v336 = vpop.permute.xlu0 %335
  %vm337 = vcmask 916480
  %v338 = vsel %vm337, %v328, %v330
  %v339 = vsel %vm337, %v330, %v332
  %v340 = vsel %vm337, %v332, %v334
  %v341 = vsel %vm337, %v334, %v336
  %346 = vrot.lane.b32.xlu0 %v280, 111
  %v347 = vpop.permute.xlu0 %346
  %348 = vrot.lane.b32.xlu0 %v281, 111
  %v349 = vpop.permute.xlu0 %348
  %350 = vrot.lane.b32.xlu0 %v282, 111
  %v351 = vpop.permute.xlu0 %350
  %352 = vrot.lane.b32.xlu0 %v283, 111
  %v353 = vpop.permute.xlu0 %352
  %354 = vrot.lane.b32.xlu0 0.0, 111
  %v355 = vpop.permute.xlu0 %354
  %vm356 = vcmask 908288
  %v357 = vsel %vm356, %v347, %v349
  %v358 = vsel %vm356, %v349, %v351
  %v359 = vsel %vm356, %v351, %v353
  %v360 = vsel %vm356, %v353, %v355
  %365 = vrot.lane.b32.xlu0 %v280, 110
  %v366 = vpop.permute.xlu0 %365
  %367 = vrot.lane.b32.xlu0 %v281, 110
  %v368 = vpop.permute.xlu0 %367
  %369 = vrot.lane.b32.xlu0 %v282, 110
  %v370 = vpop.permute.xlu0 %369
  %371 = vrot.lane.b32.xlu0 %v283, 110
  %v372 = vpop.permute.xlu0 %371
  %373 = vrot.lane.b32.xlu0 0.0, 110
  %v374 = vpop.permute.xlu0 %373
  %vm375 = vcmask 900096
  %v376 = vsel %vm375, %v366, %v368
  %v377 = vsel %vm375, %v368, %v370
  %v378 = vsel %vm375, %v370, %v372
  %v379 = vsel %vm375, %v372, %v374
  %384 = vrot.lane.b32.xlu0 %v280, 96
  %v385 = vpop.permute.xlu0 %384
  %386 = vrot.lane.b32.xlu0 %v281, 96
  %v387 = vpop.permute.xlu0 %386
  %388 = vrot.lane.b32.xlu0 %v282, 96
  %v389 = vpop.permute.xlu0 %388
  %390 = vrot.lane.b32.xlu0 %v283, 96
  %v391 = vpop.permute.xlu0 %390
  %392 = vrot.lane.b32.xlu0 0.0, 96
  %v393 = vpop.permute.xlu0 %392
  %vm394 = vcmask 785408
  %v395 = vsel %vm394, %v385, %v387
  %v396 = vsel %vm394, %v387, %v389
  %v397 = vsel %vm394, %v389, %v391
  %v398 = vsel %vm394, %v391, %v393
  %403 = vrot.lane.b32.xlu0 %v280, 95
  %v404 = vpop.permute.xlu0 %403
  %405 = vrot.lane.b32.xlu0 %v281, 95
  %v406 = vpop.permute.xlu0 %405
  %407 = vrot.lane.b32.xlu0 %v282, 95
  %v408 = vpop.permute.xlu0 %407
  %409 = vrot.lane.b32.xlu0 %v283, 95
  %v410 = vpop.permute.xlu0 %409
  %411 = vrot.lane.b32.xlu0 0.0, 95
  %v412 = vpop.permute.xlu0 %411
  %vm413 = vcmask 777216
  %v414 = vsel %vm413, %v404, %v406
  %v415 = vsel %vm413, %v406, %v408
  %v416 = vsel %vm413, %v408, %v410
  %v417 = vsel %vm413, %v410, %v412
  %422 = vrot.lane.b32.xlu0 %v280, 94
  %v423 = vpop.permute.xlu0 %422
  %424 = vrot.lane.b32.xlu0 %v281, 94
  %v425 = vpop.permute.xlu0 %424
  %426 = vrot.lane.b32.xlu0 %v282, 94
  %v427 = vpop.permute.xlu0 %426
  %428 = vrot.lane.b32.xlu0 %v283, 94
  %v429 = vpop.permute.xlu0 %428
  %430 = vrot.lane.b32.xlu0 0.0, 94
  %v431 = vpop.permute.xlu0 %430
  %vm432 = vcmask 769024
  %v433 = vsel %vm432, %v423, %v425
  %v434 = vsel %vm432, %v425, %v427
  %v435 = vsel %vm432, %v427, %v429
  %v436 = vsel %vm432, %v429, %v431
  %v441 = vld [vmem:[%s2] sm:$0xff]
  %vm442 = vcmask 596992
  %v444 = vsel %vm442, %v441, 0
  %vm446 = vcmask 1040384
  %v448 = vsel %vm446, 1.0, 0
  %450 = vmatprep.subr.mxu0 %v281
  %451 = vmatpush1.msra.mxu0 %v280
  %452 = vmatprep.subr.mxu0 %v301
  %453 = vmatpush1.msra.mxu0 %v300
  %454 = vmatprep.subr.mxu0 %v320
  %455 = vmatpush1.msra.mxu0 %v319
  %456 = vmatprep.subr.mxu0 %v339
  %457 = vmatpush1.msra.mxu0 %v338
  %458 = vmatprep.subr.mxu0 %v358
  %459 = vmatpush1.msra.mxu0 %v357
  %460 = vmatprep.subr.mxu0 %v377
  %461 = vmatpush1.msra.mxu0 %v376
  %462 = vmatprep.subr.mxu0 %v396
  %463 = vmatpush1.msra.mxu0 %v395
  %464 = vmatprep.subr.mxu0 %v415
  %465 = vmatpush1.msra.mxu0 %v414
  %466 = vmatprep.subr.mxu0 %v434
  %467 = vmatpush1.msra.mxu0 %v433
  %468 = vmatprep.subr.mxu0 %v448
  %469 = vmatpush1.msra.mxu0 %v448
  %470 = vmatprep.subr.mxu0 0.0
  %471 = vmatpush1.msra.mxu0 0.0
  %472 = vmatprep.subr.mxu0 0.0
  %473 = vmatpush1.msra.mxu0 0.0
  %474 = vmatprep.subr.mxu0 0.0
  %475 = vmatpush1.msra.mxu0 0.0
  %476 = vmatprep.subr.mxu0 0.0
  %477 = vmatpush1.msra.mxu0 0.0
  %478 = vmatprep.subr.mxu0 0.0
  %479 = vmatpush1.msra.mxu0 0.0
  %480 = vmatprep.subr.mxu0 0.0
  %481 = vmatpush1.msra.mxu0 0.0
  %482 = vmatprep.subr.mxu0 0.0
  %483 = vmatpush1.msra.mxu0 0.0
  %484 = vmatprep.subr.mxu0 0.0
  %485 = vmatpush1.msra.mxu0 0.0
  %486 = vmatprep.subr.mxu0 0.0
  %487 = vmatpush1.msra.mxu0 0.0
  %488 = vmatprep.subr.mxu0 0.0
  %489 = vmatpush1.msra.mxu0 0.0
  %490 = vmatprep.subr.mxu0 0.0
  %491 = vmatpush1.msra.mxu0 0.0
  %492 = vmatprep.subr.mxu0 0.0
  %493 = vmatpush1.msra.mxu0 0.0
  %494 = vmatprep.subr.mxu0 0.0
  %495 = vmatpush1.msra.mxu0 0.0
  %496 = vmatprep.subr.mxu0 0.0
  %497 = vmatpush1.msra.mxu0 0.0
  %498 = vmatprep.subr.mxu0 0.0
  %499 = vmatpush1.msra.mxu0 0.0
  %500 = vmatprep.subr.mxu0 0.0
  %501 = vmatpush1.msra.mxu0 0.0
  %502 = vmatprep.subr.mxu0 0.0
  %503 = vmatpush1.msra.mxu0 0.0
  %504 = vmatprep.subr.mxu0 0.0
  %505 = vmatpush1.msra.mxu0 0.0
  %506 = vmatprep.subr.mxu0 0.0
  %507 = vmatpush1.msra.mxu0 0.0
  %508 = vmatprep.subr.mxu0 0.0
  %509 = vmatpush1.msra.mxu0 0.0
  %510 = vmatprep.subr.mxu0 0.0
  %511 = vmatpush1.msra.mxu0 0.0
  %512 = vmatprep.subr.mxu0 0.0
  %513 = vmatpush1.msra.mxu0 0.0
  %514 = vmatprep.mubr.f32.mxu0 0.0
  %515 = vmatmul.mubr.f32.gmra.mrb[0].mxu0 %v444
  %v516 = vpop.f32.mrb[0].mxu0
  %v517 = vadd.f32 0.0, %v516
  %v518 = vpop.f32.mrb[0].mxu0
  %v519 = vadd.f32 0.0, %v518
  %520 = vdwg.mxu0
  %521 = vmatprep.subr.mxu0 %v283
  %522 = vmatpush1.msra.mxu0 %v282
  %523 = vmatprep.subr.mxu0 %v303
  %524 = vmatpush1.msra.mxu0 %v302
  %525 = vmatprep.subr.mxu0 %v322
  %526 = vmatpush1.msra.mxu0 %v321
  %527 = vmatprep.subr.mxu0 %v341
  %528 = vmatpush1.msra.mxu0 %v340
  %529 = vmatprep.subr.mxu0 %v360
  %530 = vmatpush1.msra.mxu0 %v359
  %531 = vmatprep.subr.mxu0 %v379
  %532 = vmatpush1.msra.mxu0 %v378
  %533 = vmatprep.subr.mxu0 %v398
  %534 = vmatpush1.msra.mxu0 %v397
  %535 = vmatprep.subr.mxu0 %v417
  %536 = vmatpush1.msra.mxu0 %v416
  %537 = vmatprep.subr.mxu0 %v436
  %538 = vmatpush1.msra.mxu0 %v435
  %539 = vmatprep.subr.mxu0 %v448
  %540 = vmatpush1.msra.mxu0 %v448
  %541 = vmatprep.subr.mxu0 0.0
  %542 = vmatpush1.msra.mxu0 0.0
  %543 = vmatprep.subr.mxu0 0.0
  %544 = vmatpush1.msra.mxu0 0.0
  %545 = vmatprep.subr.mxu0 0.0
  %546 = vmatpush1.msra.mxu0 0.0
  %547 = vmatprep.subr.mxu0 0.0
  %548 = vmatpush1.msra.mxu0 0.0
  %549 = vmatprep.subr.mxu0 0.0
  %550 = vmatpush1.msra.mxu0 0.0
  %551 = vmatprep.subr.mxu0 0.0
  %552 = vmatpush1.msra.mxu0 0.0
  %553 = vmatprep.subr.mxu0 0.0
  %554 = vmatpush1.msra.mxu0 0.0
  %555 = vmatprep.subr.mxu0 0.0
  %556 = vmatpush1.msra.mxu0 0.0
  %557 = vmatprep.subr.mxu0 0.0
  %558 = vmatpush1.msra.mxu0 0.0
  %559 = vmatprep.subr.mxu0 0.0
  %560 = vmatpush1.msra.mxu0 0.0
  %561 = vmatprep.subr.mxu0 0.0
  %562 = vmatpush1.msra.mxu0 0.0
  %563 = vmatprep.subr.mxu0 0.0
  %564 = vmatpush1.msra.mxu0 0.0
  %565 = vmatprep.subr.mxu0 0.0
  %566 = vmatpush1.msra.mxu0 0.0
  %567 = vmatprep.subr.mxu0 0.0
  %568 = vmatpush1.msra.mxu0 0.0
  %569 = vmatprep.subr.mxu0 0.0
  %570 = vmatpush1.msra.mxu0 0.0
  %571 = vmatprep.subr.mxu0 0.0
  %572 = vmatpush1.msra.mxu0 0.0
  %573 = vmatprep.subr.mxu0 0.0
  %574 = vmatpush1.msra.mxu0 0.0
  %575 = vmatprep.subr.mxu0 0.0
  %576 = vmatpush1.msra.mxu0 0.0
  %577 = vmatprep.subr.mxu0 0.0
  %578 = vmatpush1.msra.mxu0 0.0
  %579 = vmatprep.subr.mxu0 0.0
  %580 = vmatpush1.msra.mxu0 0.0
  %581 = vmatprep.subr.mxu0 0.0
  %582 = vmatpush1.msra.mxu0 0.0
  %583 = vmatprep.subr.mxu0 0.0
  %584 = vmatpush1.msra.mxu0 0.0
  %585 = vmatprep.mubr.f32.mxu0 0.0
  %586 = vmatmul.mubr.f32.gmra.mrb[0].mxu0 %v444
  %v587 = vpop.f32.mrb[0].mxu0
  %v588 = vadd.f32 0.0, %v587
  %v589 = vpop.f32.mrb[0].mxu0
  %v590 = vadd.f32 0.0, %v589
  %591 = vdwg.mxu0
  %v592 = vmax.f32 %v517, 0.0
  %v593 = vmax.f32 %v519, 0.0
  %v594 = vmax.f32 %v588, 0.0
  %v595 = vmax.f32 %v590, 0.0
  %v596 = vld [vmem:[%s6] sm:$0xf]
  %v598 = vlaneseq
  %v599 = vshrl.u32 %v598, 7
  %v600 = vsub.s32 0, %v599
  %v601 = vrot.slane %v596, %v600
  %v602 = vlaneseq
  %v603 = vshrl.u32 %v602, 7
  %v604 = vsub.s32 1, %v603
  %v605 = vrot.slane %v596, %v604
  %v606 = vlaneseq
  %v607 = vshrl.u32 %v606, 7
  %v608 = vsub.s32 2, %v607
  %v609 = vrot.slane %v596, %v608
  %v610 = vlaneseq
  %v611 = vshrl.u32 %v610, 7
  %v612 = vsub.s32 3, %v611
  %v613 = vrot.slane %v596, %v612
  %v618 = vmul.f32 %v592, %v601
  %v619 = vmul.f32 %v593, %v605
  %v620 = vmul.f32 %v594, %v609
  %v621 = vmul.f32 %v595, %v613
  %v622 = vadd.f32 %v618, %v619
  %v623 = vadd.f32 %v622, %v620
  %v624 = vadd.f32 %v623, %v621
  %625 = vadd.xlane.f32.xlu0 %v624
  %v626 = vpop.xlane.xlu0 %625
  %v627 = vmul.f32 %v618, %v592
  %v628 = vmul.f32 %v619, %v593
  %v629 = vmul.f32 %v620, %v594
  %v630 = vmul.f32 %v621, %v595
  %v631 = vadd.f32 %v627, %v628
  %v632 = vadd.f32 %v631, %v629
  %v633 = vadd.f32 %v632, %v630
  %634 = vadd.xlane.f32.xlu0 %v633
  %v635 = vpop.xlane.xlu0 %634
  %v636 = vmul.f32 %v626, 0.0034722222
  %v637 = vmul.f32 %v635, 0.0034722222
  %v638 = vmul.f32 %v636, %v636
  %v639 = vsub.f32 %v637, %v638
  %v640 = vsub.f32 %v592, %v636
  %v641 = vsub.f32 %v593, %v636
  %v642 = vsub.f32 %v594, %v636
  %v643 = vsub.f32 %v595, %v636
  %v644 = vadd.f32 %v639, 1e-05
  %v645 = vrsqrt.pop %v644
  %v646 = vmul.f32 %v640, %v645
  %v647 = vmul.f32 %v641, %v645
  %v648 = vmul.f32 %v642, %v645
  %v649 = vmul.f32 %v643, %v645
  %v650 = vmul.f32 %v646, %v269
  %v651 = vmul.f32 %v647, %v269
  %v652 = vmul.f32 %v648, %v269
  %v653 = vmul.f32 %v649, %v269
  %v654 = vadd.f32 %v650, %v278
  %v655 = vadd.f32 %v651, %v278
  %v656 = vadd.f32 %v652, %v278
  %v657 = vadd.f32 %v653, %v278
  %658 = vst [vmem:[%s7] sm:$0xff] %v654
  %659 = vst [vmem:[%s7 + $0x8] sm:$0xff] %v655
  %660 = vst [vmem:[%s7 + $0x10] sm:$0xff] %v656
  %661 = vst [vmem:[%s7 + $0x18] sm:$0xff] %v657
  // Predicated region
  $region30: #{contract_forward.1} parent=0 // pred_check
    _
  $region31: #{contract_forward.1} parent=0 // pred_check_branch
    %663 = sbr.rel (0) target = $region33
  $region32: #{contract_forward.1} parent=0 // pred_region
    _
  $region33: #{contract_forward.1} parent=0 // pred_fallthru
    _
  // Predicated region
  $region34: #{contract_forward.1} parent=0 // pred_check
    _
  $region35: #{contract_forward.1} parent=0 // pred_check_branch
    %665 = sbr.rel (0) target = $region37
  $region36: #{contract_forward.1} parent=0 // pred_region
    _
  $region37: #{contract_forward.1} parent=0 // pred_fallthru
    _

</llo_original>
